<compile_context>
chip_gen: v5e
topology: v5e:2x2
jax: 0.10.0
libtpu: 0.0.40
codegen_flags: <defaults>
</compile_context>

<pallas_src>
import jax
import jax.numpy as jnp
import numpy as np
from jax import lax
from jax.experimental import pallas as pl
from jax.experimental.pallas import tpu as pltpu


# ----------------------------------------------------------------------------
# Shared coordinate math (matches the PyTorch module exactly).
# ----------------------------------------------------------------------------
def _source_coords(bboxs, H, W, S):
    """Fractional source-pixel coords of the sampling grid.

    Reproduces theta construction + F.affine_grid + grid_sample
    un-normalization (align_corners=False).  The affine has no shear, so the
    grid separates into x coords (N, S) and y coords (N, S).
    """
    bboxs = bboxs.astype(jnp.float32)
    left = jnp.maximum(bboxs[:, 0], 0.0)
    bottom = jnp.maximum(bboxs[:, 1], 0.0)
    right = jnp.minimum(bboxs[:, 2], float(W))
    top = jnp.minimum(bboxs[:, 3], float(H))
    scale_x = (right - left) / W
    scale_y = (top - bottom) / H
    tx = (left + right) / W - 1.0     # == -1 + (left + (right-left)/2)/(W/2)
    ty = (bottom + top) / H - 1.0

    base = (2.0 * jnp.arange(S, dtype=jnp.float32) + 1.0) / S - 1.0   # (S,)
    xs = scale_x[:, None] * base[None, :] + tx[:, None]               # (N, S)
    ys = scale_y[:, None] * base[None, :] + ty[:, None]               # (N, S)

    ix = ((xs + 1.0) * W - 1.0) * 0.5   # fractional source column
    iy = ((ys + 1.0) * H - 1.0) * 0.5   # fractional source row
    return ix, iy


# ----------------------------------------------------------------------------
# Pallas kernel
# ----------------------------------------------------------------------------
def _make_stn_kernel(C, H, W, S, G, cdtype):
    GS = G * S

    def _two_tap(coord_col, size):
        # coord_col: (G*S, 1) f32 fractional coords.  Returns (G*S, size)
        # linear-interp weights; out-of-range taps never match the iota so
        # they get zero weight (== grid_sample padding_mode='zeros').
        c0 = jnp.floor(coord_col)
        frac = coord_col - c0
        c0i = c0.astype(jnp.int32)
        idx = lax.broadcasted_iota(jnp.int32, (GS, size), 1)
        w = (jnp.where(idx == c0i, 1.0 - frac, 0.0)
             + jnp.where(idx == c0i + 1, frac, 0.0))
        return w.astype(cdtype)

    def kernel(ix_ref, iy_ref, img_ref, out_ref):
        # ix_ref / iy_ref: (G*S, 1) f32 coords for this block of bboxes
        # img_ref        : (H, C*W)  image slab, same block every grid step
        # out_ref        : (G, S, C*S) lane-dense slab, out[g, i, c*S + j]

        # ---- stage 1: one fused MXU matmul over all bboxes & channels ----
        wy = _two_tap(iy_ref[...], H)                       # (G*S, H)
        # t[(g,i), (c,w)] = sum_h wy[(g,i), h] * img[c, h, w]
        t = jnp.dot(wy, img_ref[...],
                    preferred_element_type=jnp.float32)     # (G*S, C*W) f32
        t = t.astype(cdtype)

        # ---- stage 2: per channel (C small/static), batched over bboxes ----
        wx = _two_tap(ix_ref[...], W).reshape(G, S, W)      # (G, S, W)
        for c in range(C):
            t_c = t[:, c * W:(c + 1) * W].reshape(G, S, W)  # leading split
            # res_c[g, i, j] = sum_w t_c[g, i, w] * wx[g, j, w]
            res_c = jnp.einsum('giw,gjw->gij', t_c, wx,
                               preferred_element_type=jnp.float32)
            # Static lane slice of the output ref; no in-kernel concatenate.
            out_ref[:, :, c * S:(c + 1) * S] = res_c.astype(out_ref.dtype)

    return kernel


def _pick_bbox_block(n, s):
    """Bboxes per grid step: aim for G*S >= 128 rows in the stage-1 matmul
    while keeping the bbox axis tiling-friendly when it is split into blocks
    (and leaving >1 grid step when there are plenty of bboxes, for megacore)."""
    g = max(1, -(-128 // s))
    g = min(g, n)
    while g < n and (g * s) % 8 != 0:
        g += 1
    return g


def stn_forward(bboxs, img, out_size):
    """bboxs: (N, 4) float [left, bottom, right, top] in pixels.
       img:   (1, C, H, W) NCHW (batch must be 1, as in the module).
       Returns (N, C, out_size, out_size) crops in img's dtype."""
    _, C, H, W = img.shape
    N = bboxs.shape[0]
    S = int(out_size)
    cdtype = img.dtype            # native dtype on the MXU, f32 accumulation

    ix, iy = _source_coords(bboxs, H, W, S)          # (N, S) each, f32

    G = _pick_bbox_block(N, S)
    n_blocks = -(-N // G)
    N_pad = n_blocks * G
    if N_pad != N:
        # pad with coords far outside the image -> all-zero weights -> zero
        # (padded) rows, sliced away below.
        pad = jnp.full((N_pad - N, S), -2.0, jnp.float32)
        ix = jnp.concatenate([ix, pad], axis=0)
        iy = jnp.concatenate([iy, pad], axis=0)

    # Column layout so the kernel can build the weight matrices with a pure
    # lane-iota compare (no in-kernel transposes of the coord vectors).
    ix_col = ix.reshape(N_pad * S, 1)
    iy_col = iy.reshape(N_pad * S, 1)

    # Channel-fused, h-leading image slab: imgT[h, c*W + w] = img[0, c, h, w].
    # The transpose/reshape lives in the wrapper (plain XLA) so both in-kernel
    # matmuls are transpose-free.
    img_t = jnp.transpose(img[0], (1, 0, 2)).reshape(H, C * W).astype(cdtype)

    kernel = _make_stn_kernel(C, H, W, S, G, cdtype)

    itemsize = jnp.dtype(cdtype).itemsize
    cost = pl.CostEstimate(
        flops=2 * N_pad * S * H * C * W + 2 * N_pad * S * S * C * W,
        transcendentals=0,
        bytes_accessed=(H * C * W * itemsize          # image slab (read once)
                        + 2 * N_pad * S * 4           # coord columns
                        + N_pad * S * C * S * itemsize))

    out = pl.pallas_call(
        kernel,
        out_shape=jax.ShapeDtypeStruct((N_pad, S, C * S), cdtype),
        grid_spec=pltpu.PrefetchScalarGridSpec(
            num_scalar_prefetch=0,
            grid=(n_blocks,),
            in_specs=[
                pl.BlockSpec((G * S, 1), lambda n: (n, 0)),   # ix
                pl.BlockSpec((G * S, 1), lambda n: (n, 0)),   # iy
                pl.BlockSpec((H, C * W), lambda n: (0, 0)),   # image (resident)
            ],
            out_specs=pl.BlockSpec((G, S, C * S), lambda n: (n, 0, 0)),
        ),
        compiler_params=pltpu.CompilerParams(
            dimension_semantics=("parallel",)),
        cost_estimate=cost,
    )(ix_col, iy_col, img_t)

    # (N_pad, S, C*S) lane-dense slab  ->  (N, C, S, S)  (cheap wrapper-side
    # layout plumbing).
    out = out.reshape(N_pad, S, C, S).transpose(0, 2, 1, 3)[:N]
    return out


# ----------------------------------------------------------------------------
# Pure-JAX reference (test only)
# ----------------------------------------------------------------------------
def _lin_interp_weights(coord, size):
    """Dense (N, S, size) two-tap linear weights with zero padding."""
    x0f = jnp.floor(coord)
    w1 = coord - x0f
    w0 = 1.0 - w1
    x0 = x0f.astype(jnp.int32)
    idx = jnp.arange(size, dtype=jnp.int32)[None, None, :]
    oh0 = (idx == x0[..., None]).astype(jnp.float32)
    oh1 = (idx == (x0 + 1)[..., None]).astype(jnp.float32)
    return w0[..., None] * oh0 + w1[..., None] * oh1


def stn_reference(bboxs, img, out_size):
    _, C, H, W = img.shape
    ix, iy = _source_coords(bboxs, H, W, int(out_size))
    Wx = _lin_interp_weights(ix, W)    # (N, S, W)
    Wy = _lin_interp_weights(iy, H)    # (N, S, H)
    return jnp.einsum('nih,chw,njw->ncij', Wy,
                      img[0].astype(jnp.float32), Wx)


if __name__ == "__main__":
    key = jax.random.PRNGKey(0)
    k_img, k_box = jax.random.split(key)

    N, C, H, W = 2, 4, 16, 16
    out_size = 8

    img = jax.random.normal(k_img, (1, C, H, W), dtype=jnp.float32)

    # Deterministic bboxes: [left, bottom, right, top] in pixels (some edges
    # outside the image to exercise the clamps / zero padding).
    lb = jax.random.uniform(k_box, (N, 2), minval=-2.0, maxval=6.0)
    rt = lb + jax.random.uniform(jax.random.PRNGKey(1), (N, 2),
                                 minval=6.0, maxval=14.0)
    bboxs = jnp.concatenate([lb, rt], axis=1).astype(jnp.float32)

    out = stn_forward(bboxs, img, out_size)
    out = jax.block_until_ready(out)

    ref = stn_reference(bboxs, img, out_size)
    np.testing.assert_allclose(np.asarray(out), np.asarray(ref),
                               rtol=1e-5, atol=1e-5)

    assert out.shape == (N, C, out_size, out_size)
    print("KERNEL_OK")
</pallas_src>

<mosaic_0001>
module attributes {stable_mosaic.version = 11 : i64} {
  func.func @kernel(%arg0: i32, %arg1: memref<16x1xf32, #tpu.memory_space<vmem>>, %arg2: memref<16x1xf32, #tpu.memory_space<vmem>>, %arg3: memref<16x64xf32, #tpu.memory_space<vmem>>, %arg4: memref<2x8x32xf32, #tpu.memory_space<vmem>>) attributes {dimension_semantics = [#tpu.dimension_semantics<parallel>], iteration_bounds = array<i64: 1>, scalar_prefetch = 0 : i64, scratch_operands = 0 : i64, tpu.core_type = #tpu.core_type<tc>, window_params = [{transform_indices = @transform_0, window_bounds = array<i64: 16, 1>}, {transform_indices = @transform_1, window_bounds = array<i64: 16, 1>}, {pipeline_mode = #tpu.pipeline_mode<synchronous>, transform_indices = @transform_2, window_bounds = array<i64: 16, 64>}, {transform_indices = @transform_3, window_bounds = array<i64: 2, 8, 32>}]} {
    %c0 = arith.constant 0 : index
    %c0_0 = arith.constant 0 : index
    %0 = vector.load %arg2[%c0, %c0_0] : memref<16x1xf32, #tpu.memory_space<vmem>>, vector<16x1xf32>
    %1 = math.floor %0 : vector<16x1xf32>
    %2 = arith.subf %0, %1 : vector<16x1xf32>
    %3 = arith.fptosi %1 : vector<16x1xf32> to vector<16x1xi32>
    %4 = tpu.iota {dimensions = array<i32: 1>} : vector<16x16xi32>
    %5 = vector.broadcast %3 : vector<16x1xi32> to vector<16x16xi32>
    %6 = arith.cmpi eq, %4, %5 : vector<16x16xi32>
    %cst = arith.constant 1.000000e+00 : f32
    %7 = vector.broadcast %cst : f32 to vector<16x1xf32>
    %8 = arith.subf %7, %2 : vector<16x1xf32>
    %cst_1 = arith.constant 0.000000e+00 : f32
    %9 = vector.shape_cast %8 : vector<16x1xf32> to vector<16x1xf32>
    %10 = vector.broadcast %9 : vector<16x1xf32> to vector<16x16xf32>
    %11 = vector.broadcast %cst_1 : f32 to vector<16x16xf32>
    %12 = arith.select %6, %10, %11 : vector<16x16xi1>, vector<16x16xf32>
    %c1_i32 = arith.constant 1 : i32
    %13 = vector.broadcast %c1_i32 : i32 to vector<16x1xi32>
    %14 = arith.addi %3, %13 : vector<16x1xi32>
    %15 = vector.broadcast %14 : vector<16x1xi32> to vector<16x16xi32>
    %16 = arith.cmpi eq, %4, %15 : vector<16x16xi32>
    %cst_2 = arith.constant 0.000000e+00 : f32
    %17 = vector.shape_cast %2 : vector<16x1xf32> to vector<16x1xf32>
    %18 = vector.broadcast %17 : vector<16x1xf32> to vector<16x16xf32>
    %19 = vector.broadcast %cst_2 : f32 to vector<16x16xf32>
    %20 = arith.select %16, %18, %19 : vector<16x16xi1>, vector<16x16xf32>
    %21 = arith.addf %12, %20 : vector<16x16xf32>
    %c0_3 = arith.constant 0 : index
    %c0_4 = arith.constant 0 : index
    %22 = vector.load %arg3[%c0_3, %c0_4] : memref<16x64xf32, #tpu.memory_space<vmem>>, vector<16x64xf32>
    %cst_5 = arith.constant dense<0.000000e+00> : vector<16x64xf32>
    %23 = tpu.matmul %21, %22, %cst_5 {dimension_numbers = #tpu.dot_dimension_numbers<[1], [0], [0], [1], [0, 0, 1, 1], [], []>} : vector<16x16xf32>, vector<16x64xf32>, vector<16x64xf32> -> vector<16x64xf32>
    %c0_6 = arith.constant 0 : index
    %c0_7 = arith.constant 0 : index
    %24 = vector.load %arg1[%c0_6, %c0_7] : memref<16x1xf32, #tpu.memory_space<vmem>>, vector<16x1xf32>
    %25 = math.floor %24 : vector<16x1xf32>
    %26 = arith.subf %24, %25 : vector<16x1xf32>
    %27 = arith.fptosi %25 : vector<16x1xf32> to vector<16x1xi32>
    %28 = tpu.iota {dimensions = array<i32: 1>} : vector<16x16xi32>
    %29 = vector.broadcast %27 : vector<16x1xi32> to vector<16x16xi32>
    %30 = arith.cmpi eq, %28, %29 : vector<16x16xi32>
    %cst_8 = arith.constant 1.000000e+00 : f32
    %31 = vector.broadcast %cst_8 : f32 to vector<16x1xf32>
    %32 = arith.subf %31, %26 : vector<16x1xf32>
    %cst_9 = arith.constant 0.000000e+00 : f32
    %33 = vector.shape_cast %32 : vector<16x1xf32> to vector<16x1xf32>
    %34 = vector.broadcast %33 : vector<16x1xf32> to vector<16x16xf32>
    %35 = vector.broadcast %cst_9 : f32 to vector<16x16xf32>
    %36 = arith.select %30, %34, %35 : vector<16x16xi1>, vector<16x16xf32>
    %c1_i32_10 = arith.constant 1 : i32
    %37 = vector.broadcast %c1_i32_10 : i32 to vector<16x1xi32>
    %38 = arith.addi %27, %37 : vector<16x1xi32>
    %39 = vector.broadcast %38 : vector<16x1xi32> to vector<16x16xi32>
    %40 = arith.cmpi eq, %28, %39 : vector<16x16xi32>
    %cst_11 = arith.constant 0.000000e+00 : f32
    %41 = vector.shape_cast %26 : vector<16x1xf32> to vector<16x1xf32>
    %42 = vector.broadcast %41 : vector<16x1xf32> to vector<16x16xf32>
    %43 = vector.broadcast %cst_11 : f32 to vector<16x16xf32>
    %44 = arith.select %40, %42, %43 : vector<16x16xi1>, vector<16x16xf32>
    %45 = arith.addf %36, %44 : vector<16x16xf32>
    %46 = vector.shape_cast %45 : vector<16x16xf32> to vector<2x8x16xf32>
    %47 = vector.extract_strided_slice %23 {offsets = [0, 0], sizes = [16, 16], strides = [1, 1]} : vector<16x64xf32> to vector<16x16xf32>
    %48 = vector.shape_cast %47 : vector<16x16xf32> to vector<2x8x16xf32>
    "tpu.trace_start"() <{level = 10 : i32, message = "giw,gjw->gij"}> : () -> ()
    %cst_12 = arith.constant dense<0.000000e+00> : vector<2x8x8xf32>
    %49 = tpu.matmul %48, %46, %cst_12 {dimension_numbers = #tpu.dot_dimension_numbers<[2], [2], [1], [1], [0, 0, 0, 1, 1, 1], [0], [0]>} : vector<2x8x16xf32>, vector<2x8x16xf32>, vector<2x8x8xf32> -> vector<2x8x8xf32>
    "tpu.trace_stop"() : () -> ()
    %c0_13 = arith.constant 0 : index
    %c0_14 = arith.constant 0 : index
    %c0_15 = arith.constant 0 : index
    %50 = vector.load %arg4[%c0_13, %c0_14, %c0_15] : memref<2x8x32xf32, #tpu.memory_space<vmem>>, vector<2x8x8xf32>
    tpu.vector_store %arg4[%c0_13, %c0_14, %c0_15], %49 {strides = array<i32>} : memref<2x8x32xf32, #tpu.memory_space<vmem>>, vector<2x8x8xf32>,
    %51 = vector.extract_strided_slice %23 {offsets = [0, 16], sizes = [16, 16], strides = [1, 1]} : vector<16x64xf32> to vector<16x16xf32>
    %52 = vector.shape_cast %51 : vector<16x16xf32> to vector<2x8x16xf32>
    "tpu.trace_start"() <{level = 10 : i32, message = "giw,gjw->gij"}> : () -> ()
    %cst_16 = arith.constant dense<0.000000e+00> : vector<2x8x8xf32>
    %53 = tpu.matmul %52, %46, %cst_16 {dimension_numbers = #tpu.dot_dimension_numbers<[2], [2], [1], [1], [0, 0, 0, 1, 1, 1], [0], [0]>} : vector<2x8x16xf32>, vector<2x8x16xf32>, vector<2x8x8xf32> -> vector<2x8x8xf32>
    "tpu.trace_stop"() : () -> ()
    %c0_17 = arith.constant 0 : index
    %c0_18 = arith.constant 0 : index
    %c8 = arith.constant 8 : index
    %54 = vector.load %arg4[%c0_17, %c0_18, %c8] : memref<2x8x32xf32, #tpu.memory_space<vmem>>, vector<2x8x8xf32>
    tpu.vector_store %arg4[%c0_17, %c0_18, %c8], %53 {strides = array<i32>} : memref<2x8x32xf32, #tpu.memory_space<vmem>>, vector<2x8x8xf32>,
    %55 = vector.extract_strided_slice %23 {offsets = [0, 32], sizes = [16, 16], strides = [1, 1]} : vector<16x64xf32> to vector<16x16xf32>
    %56 = vector.shape_cast %55 : vector<16x16xf32> to vector<2x8x16xf32>
    "tpu.trace_start"() <{level = 10 : i32, message = "giw,gjw->gij"}> : () -> ()
    %cst_19 = arith.constant dense<0.000000e+00> : vector<2x8x8xf32>
    %57 = tpu.matmul %56, %46, %cst_19 {dimension_numbers = #tpu.dot_dimension_numbers<[2], [2], [1], [1], [0, 0, 0, 1, 1, 1], [0], [0]>} : vector<2x8x16xf32>, vector<2x8x16xf32>, vector<2x8x8xf32> -> vector<2x8x8xf32>
    "tpu.trace_stop"() : () -> ()
    %c0_20 = arith.constant 0 : index
    %c0_21 = arith.constant 0 : index
    %c16 = arith.constant 16 : index
    %58 = vector.load %arg4[%c0_20, %c0_21, %c16] : memref<2x8x32xf32, #tpu.memory_space<vmem>>, vector<2x8x8xf32>
    tpu.vector_store %arg4[%c0_20, %c0_21, %c16], %57 {strides = array<i32>} : memref<2x8x32xf32, #tpu.memory_space<vmem>>, vector<2x8x8xf32>,
    %59 = vector.extract_strided_slice %23 {offsets = [0, 48], sizes = [16, 16], strides = [1, 1]} : vector<16x64xf32> to vector<16x16xf32>
    %60 = vector.shape_cast %59 : vector<16x16xf32> to vector<2x8x16xf32>
    "tpu.trace_start"() <{level = 10 : i32, message = "giw,gjw->gij"}> : () -> ()
    %cst_22 = arith.constant dense<0.000000e+00> : vector<2x8x8xf32>
    %61 = tpu.matmul %60, %46, %cst_22 {dimension_numbers = #tpu.dot_dimension_numbers<[2], [2], [1], [1], [0, 0, 0, 1, 1, 1], [0], [0]>} : vector<2x8x16xf32>, vector<2x8x16xf32>, vector<2x8x8xf32> -> vector<2x8x8xf32>
    "tpu.trace_stop"() : () -> ()
    %c0_23 = arith.constant 0 : index
    %c0_24 = arith.constant 0 : index
    %c24 = arith.constant 24 : index
    %62 = vector.load %arg4[%c0_23, %c0_24, %c24] : memref<2x8x32xf32, #tpu.memory_space<vmem>>, vector<2x8x8xf32>
    tpu.vector_store %arg4[%c0_23, %c0_24, %c24], %61 {strides = array<i32>} : memref<2x8x32xf32, #tpu.memory_space<vmem>>, vector<2x8x8xf32>,
    return
  }
  func.func @transform_0(%arg0: i32) -> (i32, i32) {
    %c0_i32 = arith.constant 0 : i32
    %c0_i32_0 = arith.constant 0 : i32
    return %arg0, %c0_i32 : i32, i32
  }
  func.func @transform_1(%arg0: i32) -> (i32, i32) {
    %c0_i32 = arith.constant 0 : i32
    %c0_i32_0 = arith.constant 0 : i32
    return %arg0, %c0_i32 : i32, i32
  }
  func.func @transform_2(%arg0: i32) -> (i32, i32) {
    %c0_i32 = arith.constant 0 : i32
    %c0_i32_0 = arith.constant 0 : i32
    %c0_i32_1 = arith.constant 0 : i32
    return %c0_i32, %c0_i32_0 : i32, i32
  }
  func.func @transform_3(%arg0: i32) -> (i32, i32, i32) {
    %c0_i32 = arith.constant 0 : i32
    %c0_i32_0 = arith.constant 0 : i32
    %c0_i32_1 = arith.constant 0 : i32
    return %arg0, %c0_i32, %c0_i32_0 : i32, i32, i32
  }
}

</mosaic_0001>

<llo_original>
// kernel: tpu_custom_call.1
$region0: #{tpu_custom_call.1}
  #allocation0 [shape = 'u32[]', space=smem, size = 0x4, offset = 0x4, fixed_abs, tag = 'smem constant byte address 0x4 - core index']
  #allocation1 [shape = 'u32[72,128]{1,0:T(1,128)}', space=vmem, size = 0x9000, scoped, tag = 'internal scratch']
  %s0 = inlined_call_operand.vmem [shape: f32[16,1], index: 0, kind: input, shape index: {}]
  %s1 = inlined_call_operand.vmem [shape: f32[16,1], index: 1, kind: input, shape index: {}]
  %s2 = inlined_call_operand.vmem [shape: f32[16,64], index: 2, kind: input, shape index: {}]
  %s3 = inlined_call_operand.hbm [shape: f32[2,8,32], index: 3, kind: output, shape index: {}]
  %s4 = sld [smem:[#allocation0]]
  $region22: #{tpu_custom_call.1} parent=0
    _
  %s6 = ssub.s32 1, %s4
  %s7 = scalar_select 0, %s6, %s4
  $region1: #{tpu_custom_call.1} parent=0
    #allocation2 [shape = 'u8[8192]{0}', space=vmem, size = 0x2000, scoped, tag = 'output window, operand 0, single buffered']
    #allocation3 [shape = 's32[1]{0}', space=sflag, size = 0x4, scoped, tag = 'scoped memory for tpu_custom_call.1']
    %8 = vsyncpa [#allocation3], 0
    // Predicated region
    $region2: #{tpu_custom_call.1} parent=1 // pred_check
      _
    $region3: #{tpu_custom_call.1} parent=1 // pred_check_branch
      %10 = sbr.rel (0) target = $region5
    $region4: #{tpu_custom_call.1} parent=1 // pred_region
      _
    $region5: #{tpu_custom_call.1} parent=1 // pred_fallthru
      _
    // Predicated region
    $region6: #{tpu_custom_call.1} parent=1 // pred_check
      _
    $region7: #{tpu_custom_call.1} parent=1 // pred_check_branch
      %12 = sbr.rel (0) target = $region9
    $region8: #{tpu_custom_call.1} parent=1 // pred_region
      _
    $region9: #{tpu_custom_call.1} parent=1 // pred_fallthru
      _
    // Predicated region
    $region10: #{tpu_custom_call.1} parent=1 // pred_check
      _
    $region11: #{tpu_custom_call.1} parent=1 // pred_check_branch
      %14 = sbr.rel (0) target = $region13
    $region12: #{tpu_custom_call.1} parent=1 // pred_region
      _
    $region13: #{tpu_custom_call.1} parent=1 // pred_fallthru
      _
    %v15 = vld [vmem:[%s1] sm:$0xff]
    %v16 = vld [vmem:[%s1 + $0x8] sm:$0xff]
    %v17 = vfloor.f32 %v15
    %v18 = vfloor.f32 %v16
    %v19 = vsub.f32 %v15, %v17
    %v20 = vsub.f32 %v16, %v18
    %v21 = vcvt.f32.s32.to.zero.pseudo %v17
    %v22 = vcvt.f32.s32.to.zero.pseudo %v18
    %v23 = vlaneseq
    %v24 = vand.u32 %v23, 127
    %25 = vset.pattern.permute.xlu0 0
    %26 = vperm.xlu0 %25, %v21
    %v27 = vpop.permute.xlu0 %26
    %28 = vset.pattern.permute.xlu0 0
    %29 = vperm.xlu0 %28, %v22
    %v30 = vpop.permute.xlu0 %29
    %vm31 = vcmp.eq.s32.totalorder %v24, %v27
    %vm32 = vcmp.eq.s32.totalorder %v24, %v30
    %v33 = vsub.f32 1.0, %v19
    %v34 = vsub.f32 1.0, %v20
    %36 = vset.pattern.permute.xlu0 0
    %37 = vperm.xlu0 %36, %v33
    %v38 = vpop.permute.xlu0 %37
    %41 = vset.pattern.permute.xlu0 0
    %42 = vperm.xlu0 %41, %v34
    %v43 = vpop.permute.xlu0 %42
    %v45 = vsel %vm31, %v38, 0.0
    %v46 = vsel %vm32, %v43, 0.0
    %v47 = vadd.s32 %v21, 1
    %v48 = vadd.s32 %v22, 1
    %49 = vset.pattern.permute.xlu0 0
    %50 = vperm.xlu0 %49, %v47
    %v51 = vpop.permute.xlu0 %50
    %52 = vset.pattern.permute.xlu0 0
    %53 = vperm.xlu0 %52, %v48
    %v54 = vpop.permute.xlu0 %53
    %vm55 = vcmp.eq.s32.totalorder %v24, %v51
    %vm56 = vcmp.eq.s32.totalorder %v24, %v54
    %58 = vset.pattern.permute.xlu0 0
    %59 = vperm.xlu0 %58, %v19
    %v60 = vpop.permute.xlu0 %59
    %63 = vset.pattern.permute.xlu0 0
    %64 = vperm.xlu0 %63, %v20
    %v65 = vpop.permute.xlu0 %64
    %v67 = vsel %vm55, %v60, 0.0
    %v68 = vsel %vm56, %v65, 0.0
    %v69 = vadd.f32 %v45, %v67
    %v70 = vadd.f32 %v46, %v68
    %v71 = vld [vmem:[%s2] sm:$0xff]
    %v72 = vld [vmem:[%s2 + $0x8] sm:$0xff]
    %vm73 = vcmask 130048
    %v75 = vsel %vm73, %v69, 0
    %v78 = vsel %vm73, %v70, 0
    %80 = vmatpush.msra.mxu0 0.0
    %81 = vmatpush.msra.mxu0 0.0
    %82 = vmatpush.msra.mxu0 0.0
    %83 = vmatpush.msra.mxu0 0.0
    %84 = vmatpush.msra.mxu0 0.0
    %85 = vmatpush.msra.mxu0 0.0
    %86 = vmatpush.msra.mxu0 0.0
    %87 = vmatpush.msra.mxu0 0.0
    %88 = vmatpush.msra.mxu0 0.0
    %89 = vmatpush.msra.mxu0 0.0
    %90 = vmatpush.msra.mxu0 0.0
    %91 = vmatpush.msra.mxu0 0.0
    %92 = vmatpush.msra.mxu0 0.0
    %93 = vmatpush.msra.mxu0 0.0
    %94 = vmatpush.msra.mxu0 %v72
    %95 = vmatpush.msra.mxu0 %v71
    %96 = vmatmul.f32.gmra.mxu0 %v75
    %v97 = vpop.f32.mrf.mxu0
    %v98 = vadd.f32 0.0, %v97
    %99 = vmatmul.f32.gmra.mxu0 %v78
    %v100 = vpop.f32.mrf.mxu0
    %v101 = vadd.f32 0.0, %v100
    %102 = vdwg.mxu0
    %v103 = vld [vmem:[%s0] sm:$0xff]
    %v104 = vld [vmem:[%s0 + $0x8] sm:$0xff]
    %v105 = vfloor.f32 %v103
    %v106 = vfloor.f32 %v104
    %v107 = vsub.f32 %v103, %v105
    %v108 = vsub.f32 %v104, %v106
    %v109 = vcvt.f32.s32.to.zero.pseudo %v105
    %v110 = vcvt.f32.s32.to.zero.pseudo %v106
    %111 = vset.pattern.permute.xlu0 0
    %112 = vperm.xlu0 %111, %v109
    %v113 = vpop.permute.xlu0 %112
    %114 = vset.pattern.permute.xlu0 0
    %115 = vperm.xlu0 %114, %v110
    %v116 = vpop.permute.xlu0 %115
    %vm117 = vcmp.eq.s32.totalorder %v24, %v113
    %vm118 = vcmp.eq.s32.totalorder %v24, %v116
    %v119 = vsub.f32 1.0, %v107
    %v120 = vsub.f32 1.0, %v108
    %122 = vset.pattern.permute.xlu0 0
    %123 = vperm.xlu0 %122, %v119
    %v124 = vpop.permute.xlu0 %123
    %127 = vset.pattern.permute.xlu0 0
    %128 = vperm.xlu0 %127, %v120
    %v129 = vpop.permute.xlu0 %128
    %v131 = vsel %vm117, %v124, 0.0
    %v132 = vsel %vm118, %v129, 0.0
    %v133 = vadd.s32 %v109, 1
    %v134 = vadd.s32 %v110, 1
    %135 = vset.pattern.permute.xlu0 0
    %136 = vperm.xlu0 %135, %v133
    %v137 = vpop.permute.xlu0 %136
    %138 = vset.pattern.permute.xlu0 0
    %139 = vperm.xlu0 %138, %v134
    %v140 = vpop.permute.xlu0 %139
    %vm141 = vcmp.eq.s32.totalorder %v24, %v137
    %vm142 = vcmp.eq.s32.totalorder %v24, %v140
    %144 = vset.pattern.permute.xlu0 0
    %145 = vperm.xlu0 %144, %v107
    %v146 = vpop.permute.xlu0 %145
    %149 = vset.pattern.permute.xlu0 0
    %150 = vperm.xlu0 %149, %v108
    %v151 = vpop.permute.xlu0 %150
    %v153 = vsel %vm141, %v146, 0.0
    %v154 = vsel %vm142, %v151, 0.0
    %v155 = vadd.f32 %v131, %v153
    %v156 = vadd.f32 %v132, %v154
    %v158 = vsel %vm73, %v98, 0
    %v161 = vsel %vm73, %v155, 0
    %163 = vmatpush.xpose.msra.mxu0 0.0
    %164 = vmatpush.xpose.msra.mxu0 0.0
    %165 = vmatpush.xpose.msra.mxu0 0.0
    %166 = vmatpush.xpose.msra.mxu0 0.0
    %167 = vmatpush.xpose.msra.mxu0 0.0
    %168 = vmatpush.xpose.msra.mxu0 0.0
    %169 = vmatpush.xpose.msra.mxu0 0.0
    %170 = vmatpush.xpose.msra.mxu0 0.0
    %171 = vmatpush.xpose.msra.mxu0 0.0
    %172 = vmatpush.xpose.msra.mxu0 0.0
    %173 = vmatpush.xpose.msra.mxu0 0.0
    %174 = vmatpush.xpose.msra.mxu0 0.0
    %175 = vmatpush.xpose.msra.mxu0 0.0
    %176 = vmatpush.xpose.msra.mxu0 0.0
    %177 = vmatpush.xpose.msra.mxu0 0.0
    %178 = vmatpush.xpose.msra.mxu0 %v161
    %179 = vmatmul.f32.gmra.mxu0 %v158
    %v180 = vpop.f32.mrf.mxu0
    %v181 = vadd.f32 0.0, %v180
    %182 = vdwg.mxu0
    %v184 = vsel %vm73, %v101, 0
    %v187 = vsel %vm73, %v156, 0
    %189 = vmatpush.xpose.msra.mxu0 0.0
    %190 = vmatpush.xpose.msra.mxu0 0.0
    %191 = vmatpush.xpose.msra.mxu0 0.0
    %192 = vmatpush.xpose.msra.mxu0 0.0
    %193 = vmatpush.xpose.msra.mxu0 0.0
    %194 = vmatpush.xpose.msra.mxu0 0.0
    %195 = vmatpush.xpose.msra.mxu0 0.0
    %196 = vmatpush.xpose.msra.mxu0 0.0
    %197 = vmatpush.xpose.msra.mxu0 0.0
    %198 = vmatpush.xpose.msra.mxu0 0.0
    %199 = vmatpush.xpose.msra.mxu0 0.0
    %200 = vmatpush.xpose.msra.mxu0 0.0
    %201 = vmatpush.xpose.msra.mxu0 0.0
    %202 = vmatpush.xpose.msra.mxu0 0.0
    %203 = vmatpush.xpose.msra.mxu0 0.0
    %204 = vmatpush.xpose.msra.mxu0 %v187
    %205 = vmatmul.f32.gmra.mxu0 %v184
    %v206 = vpop.f32.mrf.mxu0
    %v207 = vadd.f32 0.0, %v206
    %208 = vdwg.mxu0
    %vm209 = vcmask 64512
    %210 = vst.msk [vmem:[#allocation2] sm:$0xff] %vm209, %v181
    %211 = vst.msk [vmem:[#allocation2 + $0x8] sm:$0xff] %vm209, %v207
    %212 = vrot.lane.b32.xlu0 %v98, 112
    %v213 = vpop.permute.xlu0 %212
    %v214 = vsel %vm73, %v213, 0
    %216 = vmatpush.xpose.msra.mxu0 0.0
    %217 = vmatpush.xpose.msra.mxu0 0.0
    %218 = vmatpush.xpose.msra.mxu0 0.0
    %219 = vmatpush.xpose.msra.mxu0 0.0
    %220 = vmatpush.xpose.msra.mxu0 0.0
    %221 = vmatpush.xpose.msra.mxu0 0.0
    %222 = vmatpush.xpose.msra.mxu0 0.0
    %223 = vmatpush.xpose.msra.mxu0 0.0
    %224 = vmatpush.xpose.msra.mxu0 0.0
    %225 = vmatpush.xpose.msra.mxu0 0.0
    %226 = vmatpush.xpose.msra.mxu0 0.0
    %227 = vmatpush.xpose.msra.mxu0 0.0
    %228 = vmatpush.xpose.msra.mxu0 0.0
    %229 = vmatpush.xpose.msra.mxu0 0.0
    %230 = vmatpush.xpose.msra.mxu0 0.0
    %231 = vmatpush.xpose.msra.mxu0 %v161
    %232 = vmatmul.f32.gmra.mxu0 %v214
    %v233 = vpop.f32.mrf.mxu0
    %v234 = vadd.f32 0.0, %v233
    %235 = vdwg.mxu0
    %236 = vrot.lane.b32.xlu0 %v101, 112
    %v237 = vpop.permute.xlu0 %236
    %v238 = vsel %vm73, %v237, 0
    %240 = vmatpush.xpose.msra.mxu0 0.0
    %241 = vmatpush.xpose.msra.mxu0 0.0
    %242 = vmatpush.xpose.msra.mxu0 0.0
    %243 = vmatpush.xpose.msra.mxu0 0.0
    %244 = vmatpush.xpose.msra.mxu0 0.0
    %245 = vmatpush.xpose.msra.mxu0 0.0
    %246 = vmatpush.xpose.msra.mxu0 0.0
    %247 = vmatpush.xpose.msra.mxu0 0.0
    %248 = vmatpush.xpose.msra.mxu0 0.0
    %249 = vmatpush.xpose.msra.mxu0 0.0
    %250 = vmatpush.xpose.msra.mxu0 0.0
    %251 = vmatpush.xpose.msra.mxu0 0.0
    %252 = vmatpush.xpose.msra.mxu0 0.0
    %253 = vmatpush.xpose.msra.mxu0 0.0
    %254 = vmatpush.xpose.msra.mxu0 0.0
    %255 = vmatpush.xpose.msra.mxu0 %v187
    %256 = vmatmul.f32.gmra.mxu0 %v238
    %v257 = vpop.f32.mrf.mxu0
    %v258 = vadd.f32 0.0, %v257
    %259 = vdwg.mxu0
    %262 = vrot.lane.b32.xlu0 %v234, 8
    %v263 = vpop.permute.xlu0 %262
    %264 = vrot.lane.b32.xlu0 %v258, 8
    %v265 = vpop.permute.xlu0 %264
    %vm268 = vcmask 130112
    %269 = vst.msk [vmem:[#allocation2] sm:$0xff] %vm268, %v263
    %270 = vst.msk [vmem:[#allocation2 + $0x8] sm:$0xff] %vm268, %v265
    %271 = vrot.lane.b32.xlu0 %v98, 96
    %v272 = vpop.permute.xlu0 %271
    %v273 = vsel %vm73, %v272, 0
    %275 = vmatpush.xpose.msra.mxu0 0.0
    %276 = vmatpush.xpose.msra.mxu0 0.0
    %277 = vmatpush.xpose.msra.mxu0 0.0
    %278 = vmatpush.xpose.msra.mxu0 0.0
    %279 = vmatpush.xpose.msra.mxu0 0.0
    %280 = vmatpush.xpose.msra.mxu0 0.0
    %281 = vmatpush.xpose.msra.mxu0 0.0
    %282 = vmatpush.xpose.msra.mxu0 0.0
    %283 = vmatpush.xpose.msra.mxu0 0.0
    %284 = vmatpush.xpose.msra.mxu0 0.0
    %285 = vmatpush.xpose.msra.mxu0 0.0
    %286 = vmatpush.xpose.msra.mxu0 0.0
    %287 = vmatpush.xpose.msra.mxu0 0.0
    %288 = vmatpush.xpose.msra.mxu0 0.0
    %289 = vmatpush.xpose.msra.mxu0 0.0
    %290 = vmatpush.xpose.msra.mxu0 %v161
    %291 = vmatmul.f32.gmra.mxu0 %v273
    %v292 = vpop.f32.mrf.mxu0
    %v293 = vadd.f32 0.0, %v292
    %294 = vdwg.mxu0
    %295 = vrot.lane.b32.xlu0 %v101, 96
    %v296 = vpop.permute.xlu0 %295
    %v297 = vsel %vm73, %v296, 0
    %299 = vmatpush.xpose.msra.mxu0 0.0
    %300 = vmatpush.xpose.msra.mxu0 0.0
    %301 = vmatpush.xpose.msra.mxu0 0.0
    %302 = vmatpush.xpose.msra.mxu0 0.0
    %303 = vmatpush.xpose.msra.mxu0 0.0
    %304 = vmatpush.xpose.msra.mxu0 0.0
    %305 = vmatpush.xpose.msra.mxu0 0.0
    %306 = vmatpush.xpose.msra.mxu0 0.0
    %307 = vmatpush.xpose.msra.mxu0 0.0
    %308 = vmatpush.xpose.msra.mxu0 0.0
    %309 = vmatpush.xpose.msra.mxu0 0.0
    %310 = vmatpush.xpose.msra.mxu0 0.0
    %311 = vmatpush.xpose.msra.mxu0 0.0
    %312 = vmatpush.xpose.msra.mxu0 0.0
    %313 = vmatpush.xpose.msra.mxu0 0.0
    %314 = vmatpush.xpose.msra.mxu0 %v187
    %315 = vmatmul.f32.gmra.mxu0 %v297
    %v316 = vpop.f32.mrf.mxu0
    %v317 = vadd.f32 0.0, %v316
    %318 = vdwg.mxu0
    %321 = vrot.lane.b32.xlu0 %v293, 16
    %v322 = vpop.permute.xlu0 %321
    %323 = vrot.lane.b32.xlu0 %v317, 16
    %v324 = vpop.permute.xlu0 %323
    %vm327 = vcmask 195712
    %328 = vst.msk [vmem:[#allocation2] sm:$0xff] %vm327, %v322
    %329 = vst.msk [vmem:[#allocation2 + $0x8] sm:$0xff] %vm327, %v324
    %330 = vrot.lane.b32.xlu0 %v98, 80
    %v331 = vpop.permute.xlu0 %330
    %v332 = vsel %vm73, %v331, 0
    %334 = vmatpush.xpose.msra.mxu0 0.0
    %335 = vmatpush.xpose.msra.mxu0 0.0
    %336 = vmatpush.xpose.msra.mxu0 0.0
    %337 = vmatpush.xpose.msra.mxu0 0.0
    %338 = vmatpush.xpose.msra.mxu0 0.0
    %339 = vmatpush.xpose.msra.mxu0 0.0
    %340 = vmatpush.xpose.msra.mxu0 0.0
    %341 = vmatpush.xpose.msra.mxu0 0.0
    %342 = vmatpush.xpose.msra.mxu0 0.0
    %343 = vmatpush.xpose.msra.mxu0 0.0
    %344 = vmatpush.xpose.msra.mxu0 0.0
    %345 = vmatpush.xpose.msra.mxu0 0.0
    %346 = vmatpush.xpose.msra.mxu0 0.0
    %347 = vmatpush.xpose.msra.mxu0 0.0
    %348 = vmatpush.xpose.msra.mxu0 0.0
    %349 = vmatpush.xpose.msra.mxu0 %v161
    %350 = vmatmul.f32.gmra.mxu0 %v332
    %v351 = vpop.f32.mrf.mxu0
    %v352 = vadd.f32 0.0, %v351
    %353 = vdwg.mxu0
    %354 = vrot.lane.b32.xlu0 %v101, 80
    %v355 = vpop.permute.xlu0 %354
    %v356 = vsel %vm73, %v355, 0
    %358 = vmatpush.xpose.msra.mxu0 0.0
    %359 = vmatpush.xpose.msra.mxu0 0.0
    %360 = vmatpush.xpose.msra.mxu0 0.0
    %361 = vmatpush.xpose.msra.mxu0 0.0
    %362 = vmatpush.xpose.msra.mxu0 0.0
    %363 = vmatpush.xpose.msra.mxu0 0.0
    %364 = vmatpush.xpose.msra.mxu0 0.0
    %365 = vmatpush.xpose.msra.mxu0 0.0
    %366 = vmatpush.xpose.msra.mxu0 0.0
    %367 = vmatpush.xpose.msra.mxu0 0.0
    %368 = vmatpush.xpose.msra.mxu0 0.0
    %369 = vmatpush.xpose.msra.mxu0 0.0
    %370 = vmatpush.xpose.msra.mxu0 0.0
    %371 = vmatpush.xpose.msra.mxu0 0.0
    %372 = vmatpush.xpose.msra.mxu0 0.0
    %373 = vmatpush.xpose.msra.mxu0 %v187
    %374 = vmatmul.f32.gmra.mxu0 %v356
    %v375 = vpop.f32.mrf.mxu0
    %v376 = vadd.f32 0.0, %v375
    %377 = vdwg.mxu0
    %380 = vrot.lane.b32.xlu0 %v352, 24
    %v381 = vpop.permute.xlu0 %380
    %382 = vrot.lane.b32.xlu0 %v376, 24
    %v383 = vpop.permute.xlu0 %382
    %vm386 = vcmask 261312
    %387 = vst.msk [vmem:[#allocation2] sm:$0xff] %vm386, %v381
    %388 = vst.msk [vmem:[#allocation2 + $0x8] sm:$0xff] %vm386, %v383
    // Predicated region
    $region14: #{tpu_custom_call.1} parent=1 // pred_check
      _
    $region15: #{tpu_custom_call.1} parent=1 // pred_check_branch
      %390 = sbr.rel (0) target = $region17
    $region16: #{tpu_custom_call.1} parent=1 // pred_region
      %392 = vsyncadd [#allocation3], 0
      %s393 = sshll.u32 [#allocation2], 4
      %s394 = int_to_ptr.vmem [resolvable:$true] %s393
      %s395 = sshll.u32 %s3, 4
      %s396 = int_to_ptr.hbm [resolvable:$true] %s395
      %401 = dma.vmem_to_hbm [thread:$0]  %s394, 256, %s396, [#allocation3], 128, 128, 8
    $region17: #{tpu_custom_call.1} parent=1 // pred_fallthru
      _
    // Predicated region
    $region18: #{tpu_custom_call.1} parent=1 // pred_check
      _
    $region19: #{tpu_custom_call.1} parent=1 // pred_check_branch
      %403 = sbr.rel (0) target = $region21
    $region20: #{tpu_custom_call.1} parent=1 // pred_region
      %405 = dma.done [#allocation3], 256
    $region21: #{tpu_custom_call.1} parent=1 // pred_fallthru
      _
    %406 = vsyncpa [#allocation3], 1

</llo_original>
